<compile_context>
chip_gen: v7x
topology: tpu7x:2x2x1
jax: 0.10.0
libtpu: 0.0.40
codegen_flags: <defaults>
</compile_context>

<pallas_src>
import functools

import jax
import jax.numpy as jnp
from jax.experimental import pallas as pl
from jax.experimental.pallas import tpu as pltpu


# ----------------------------------------------------------------------------
# Transform chain: deterministic compile-time constants (baked once, no host
# round-trips per call).
# ----------------------------------------------------------------------------
DEFAULT_TRANSFORMS = (
    ("affine", (1.1, 0.05)),   # x * scale + shift
    ("tanh", ()),              # tanh(x)
    ("gain", (0.9,)),          # x * gain
)


def _apply_transform(name, params, x):
    if name == "affine":
        scale, shift = params
        return x * scale + shift
    if name == "tanh":
        return jnp.tanh(x)
    if name == "gain":
        (gain,) = params
        return x * gain
    raise ValueError(f"unknown transform {name}")


# ----------------------------------------------------------------------------
# Pallas kernel: fused elementwise composition of all transforms on one tile.
# ----------------------------------------------------------------------------
def compose_kernel(x_ref, o_ref, *, transforms, compute_dtype):
    x = x_ref[...].astype(compute_dtype)
    # Trace-time Python loop over the transform list -> fully fused chain.
    for name, params in transforms:
        x = _apply_transform(name, params, x)
    o_ref[...] = x.astype(o_ref.dtype)


# Tiling constants: 256 x 512 f32 tile = 512 KiB per buffer; with default
# double-buffering of one input + one output stream that is ~2 MiB of VMEM,
# comfortably inside v5e/v6e (128 MiB) and v7x (64 MiB).
LANES = 512          # multiple of 128 (lane-dense, unmasked vst)
MAX_TILE_ROWS = 256  # multiple of 8 (sublane constraint)


@functools.partial(jax.jit, static_argnames="transforms")
def compose_forward(x, transforms=DEFAULT_TRANSFORMS):
    """Apply the composed (fused) transform chain to a tensor of any shape."""
    orig_shape = x.shape
    dtype = x.dtype
    total = x.size

    # Flatten to a lane-dense 2D slab; pad with zeros to a whole number of
    # (tile_rows, LANES) tiles so every grid step is a full block.
    rows = pl.cdiv(total, LANES)
    tile_rows = min(MAX_TILE_ROWS, rows)          # full-dim block if tiny
    padded_rows = tile_rows * pl.cdiv(rows, tile_rows)
    padded_total = padded_rows * LANES

    flat = x.reshape(-1)
    if padded_total != total:
        flat = jnp.pad(flat, (0, padded_total - total))
    x2d = flat.reshape(padded_rows, LANES)

    # Compute in bf16 when data is bf16 (v6e/v7x bf16 VPU/EUP); else f32.
    compute_dtype = jnp.bfloat16 if dtype == jnp.bfloat16 else jnp.float32

    kernel = functools.partial(
        compose_kernel, transforms=transforms, compute_dtype=compute_dtype
    )

    grid = (padded_rows // tile_rows,)
    out2d = pl.pallas_call(
        kernel,
        out_shape=jax.ShapeDtypeStruct((padded_rows, LANES), dtype),
        grid=grid,
        in_specs=[pl.BlockSpec((tile_rows, LANES), lambda i: (i, 0))],
        out_specs=pl.BlockSpec((tile_rows, LANES), lambda i: (i, 0)),
        # Elementwise, same shape/dtype: reuse the input slab in place.
        input_output_aliases={0: 0},
        compiler_params=pltpu.CompilerParams(
            dimension_semantics=("parallel",),
            vmem_limit_bytes=32 * 1024 * 1024,
        ),
    )(x2d)

    return out2d.reshape(-1)[:total].reshape(orig_shape)


if __name__ == "__main__":
    key = jax.random.PRNGKey(0)

    # Small NCHW input consistent with the module's forward (any tensor).
    x = jax.random.normal(key, (2, 4, 16, 16), dtype=jnp.float32)

    out = compose_forward(x, DEFAULT_TRANSFORMS)
    out = jax.block_until_ready(out)

    # Reference check (pure JAX) for the same composed chain.
    ref = x
    for name, params in DEFAULT_TRANSFORMS:
        ref = _apply_transform(name, params, ref)
    assert out.shape == x.shape
    assert out.dtype == x.dtype
    assert jnp.allclose(out, ref, atol=1e-5, rtol=1e-5)

    # TODO(synk): Compose over *arbitrary* user-supplied torch sub-modules has
    # no generic Pallas equivalent; only elementwise chains are fused here.
    print("KERNEL_OK")
</pallas_src>

<mosaic_0001>
module attributes {stable_mosaic.version = 11 : i64} {
  func.func @compose_kernel(%arg0: i32, %arg1: memref<4x512xf32, #tpu.memory_space<vmem>>, %arg2: memref<4x512xf32, #tpu.memory_space<vmem>>) attributes {dimension_semantics = [#tpu.dimension_semantics<parallel>], iteration_bounds = array<i64: 1>, scalar_prefetch = 0 : i64, scratch_operands = 0 : i64, tpu.core_type = #tpu.core_type<tc>, window_params = [{transform_indices = @transform_0, window_bounds = array<i64: 4, 512>}, {transform_indices = @transform_1, window_bounds = array<i64: 4, 512>}]} {
    %c0 = arith.constant 0 : index
    %c0_0 = arith.constant 0 : index
    %0 = vector.load %arg1[%c0, %c0_0] : memref<4x512xf32, #tpu.memory_space<vmem>>, vector<4x512xf32>
    %cst = arith.constant 1.100000e+00 : f32
    %1 = vector.broadcast %cst : f32 to vector<4x512xf32>
    %2 = arith.mulf %0, %1 : vector<4x512xf32>
    %cst_1 = arith.constant 5.000000e-02 : f32
    %3 = vector.broadcast %cst_1 : f32 to vector<4x512xf32>
    %4 = arith.addf %2, %3 : vector<4x512xf32>
    %5 = math.tanh %4 : vector<4x512xf32>
    %cst_2 = arith.constant 0.899999976 : f32
    %6 = vector.broadcast %cst_2 : f32 to vector<4x512xf32>
    %7 = arith.mulf %5, %6 : vector<4x512xf32>
    %c0_3 = arith.constant 0 : index
    %c0_4 = arith.constant 0 : index
    %8 = vector.load %arg2[%c0_3, %c0_4] : memref<4x512xf32, #tpu.memory_space<vmem>>, vector<4x512xf32>
    tpu.vector_store %arg2[%c0_3, %c0_4], %7 {strides = array<i32>} : memref<4x512xf32, #tpu.memory_space<vmem>>, vector<4x512xf32>,
    return
  }
  func.func @transform_0(%arg0: i32) -> (i32, i32) {
    %c0_i32 = arith.constant 0 : i32
    %c0_i32_0 = arith.constant 0 : i32
    return %arg0, %c0_i32 : i32, i32
  }
  func.func @transform_1(%arg0: i32) -> (i32, i32) {
    %c0_i32 = arith.constant 0 : i32
    %c0_i32_0 = arith.constant 0 : i32
    return %arg0, %c0_i32 : i32, i32
  }
}

</mosaic_0001>

<llo_original>
// kernel: compose_forward.1
$region0: #{compose_forward.1}
  #allocation0 [shape = 'u32[]', space=smem, size = 0x4, offset = 0x4, fixed_abs, tag = 'smem constant byte address 0x4 - core index']
  #allocation1 [shape = 'u32[144,128]{1,0:T(1,128)}', space=vmem, size = 0x12000, scoped, tag = 'internal scratch']
  %s0 = inlined_call_operand.vmem [shape: f32[4,512], index: 0, kind: input, shape index: {}, may-alias: {0,1}]
  %s1 = inlined_call_operand.vmem [shape: f32[4,512], index: 1, kind: output, shape index: {}, may-alias: {0,1}]
  %s2 = sld [smem:[#allocation0]]
  $region14: #{compose_forward.1} parent=0
    _
  %s4 = ssub.s32 1, %s2
  %s5 = scalar_select 0, %s4, %s2
  // Predicated region
  $region2: #{compose_forward.1} parent=0 // pred_check
    _
  $region3: #{compose_forward.1} parent=0 // pred_check_branch
    %7 = sbr.rel (0) target = $region5
  $region4: #{compose_forward.1} parent=0 // pred_region
    _
  $region5: #{compose_forward.1} parent=0 // pred_fallthru
    _
  %v8 = vld [vmem:[%s0] sm:$0xff]
  %v9 = vld [vmem:[%s0 + $0x8] sm:$0xff]
  %v10 = vmul.f32 %v8, 1.1
  %v11 = vmul.f32 %v9, 1.1
  %v12 = vadd.f32 %v10, 0.05
  %v13 = vadd.f32 %v11, 0.05
  %v14 = vtanh.pop %v12
  %v15 = vtanh.pop %v13
  %v16 = vmul.f32 %v14, 0.9
  %v17 = vmul.f32 %v15, 0.9
  %18 = vst [vmem:[%s1] sm:$0xff] %v16
  %19 = vst [vmem:[%s1 + $0x8] sm:$0xff] %v17
  // Predicated region
  $region6: #{compose_forward.1} parent=0 // pred_check
    _
  $region7: #{compose_forward.1} parent=0 // pred_check_branch
    %21 = sbr.rel (0) target = $region9
  $region8: #{compose_forward.1} parent=0 // pred_region
    _
  $region9: #{compose_forward.1} parent=0 // pred_fallthru
    _
  // Predicated region
  $region10: #{compose_forward.1} parent=0 // pred_check
    _
  $region11: #{compose_forward.1} parent=0 // pred_check_branch
    %23 = sbr.rel (0) target = $region13
  $region12: #{compose_forward.1} parent=0 // pred_region
    _
  $region13: #{compose_forward.1} parent=0 // pred_fallthru
    _

</llo_original>
